<compile_context>
chip_gen: v6e
topology: v6e:2x2x1
jax: 0.10.0
libtpu: 0.0.40
codegen_flags: <defaults>
</compile_context>

<pallas_src>
import functools

import jax
import jax.numpy as jnp
from jax.experimental import pallas as pl
from jax.experimental.pallas import tpu as pltpu


def _round_up(x, m):
    return ((x + m - 1) // m) * m


# ---------------------------------------------------------------------------
# Kernel body:  o = x @ W + b   (one row tile per grid step, W/bias resident)
# ---------------------------------------------------------------------------
def _linear_kernel(x_ref, w_ref, b_ref, o_ref):
    # x_ref: (TM, D)  w_ref: (D, Fp)  b_ref: (1, Fp) f32  o_ref: (TM, Fp)
    acc = jnp.dot(x_ref[...], w_ref[...], preferred_element_type=jnp.float32)
    o_ref[...] = (acc + b_ref[...].astype(jnp.float32)).astype(o_ref.dtype)


# ---------------------------------------------------------------------------
# Row-tiled fused linear:  y = x @ W + b
# ---------------------------------------------------------------------------
def pallas_linear(x2d, w, b, *, tm=1024, compute_dtype=None, out_dtype=None):
    """x2d: (M, D), w: (D, F), b: (F,) -> (M, F).

    compute_dtype: optional dtype (e.g. jnp.bfloat16) for x/W at the call
    boundary; accumulation and bias add remain f32.  Output dtype defaults to
    the input dtype of x2d.
    """
    M, D = x2d.shape
    F = w.shape[1]
    out_dtype = out_dtype if out_dtype is not None else x2d.dtype

    if compute_dtype is not None:
        x2d = x2d.astype(compute_dtype)
        w = w.astype(compute_dtype)
    b = b.astype(jnp.float32)

    # Lane-dense output / full MXU N-tile: pad F up to a multiple of 128 with
    # zero columns (sliced off by the caller; real columns stay exact).
    Fp = _round_up(max(F, 1), 128)
    if Fp != F:
        w = jnp.pad(w, ((0, 0), (0, Fp - F)))
        b = jnp.pad(b, (0, Fp - F))
    b2d = b.reshape(1, Fp)

    # No wrapper pad along M (full HBM copy of x): ragged last row-block is
    # masked by Pallas.  Only the degenerate M < 8 (sub-sublane) case pads a
    # handful of rows, which is a few KB at most.
    if M < 8:
        x2d = jnp.pad(x2d, ((0, 8 - M), (0, 0)))
    Mk = x2d.shape[0]
    tm_eff = min(tm, _round_up(Mk, 8))          # multiple of 8 sublanes
    grid = (pl.cdiv(Mk, tm_eff),)

    xb = jnp.dtype(x2d.dtype).itemsize
    ob = jnp.dtype(out_dtype).itemsize
    # Double-buffered x/out tiles + double-buffered resident W & bias + headroom.
    vmem_bytes = (2 * tm_eff * D * xb + 2 * tm_eff * Fp * ob
                  + 2 * D * Fp * xb + 2 * Fp * 4 + (4 << 20))
    vmem_limit = int(min(vmem_bytes, 48 << 20))

    out = pl.pallas_call(
        _linear_kernel,
        out_shape=jax.ShapeDtypeStruct((Mk, Fp), out_dtype),
        grid_spec=pltpu.PrefetchScalarGridSpec(
            num_scalar_prefetch=0,
            grid=grid,
            in_specs=[
                pl.BlockSpec((tm_eff, D), lambda i: (i, 0)),   # x row tile
                pl.BlockSpec((D, Fp), lambda i: (0, 0)),       # W resident
                pl.BlockSpec((1, Fp), lambda i: (0, 0)),       # bias resident
            ],
            out_specs=pl.BlockSpec((tm_eff, Fp), lambda i: (i, 0)),
        ),
        compiler_params=pltpu.CompilerParams(
            dimension_semantics=("parallel",),   # megacore sharding on v7x
            vmem_limit_bytes=vmem_limit,
        ),
        cost_estimate=pl.CostEstimate(
            flops=2 * Mk * D * Fp,
            transcendentals=0,
            bytes_accessed=Mk * D * xb + D * Fp * xb + Mk * Fp * ob,
        ),
    )(x2d, w, b2d)
    return out[:M, :F]


# ---------------------------------------------------------------------------
# OutputProcess forward
# ---------------------------------------------------------------------------
def output_process_forward(x, params, *, data_rep, njoints, nfeats,
                           compute_dtype=None, tm=1024):
    """x: (nframes, bs, latent_dim) -> (bs, njoints, nfeats, nframes)."""
    nframes, bs, d = x.shape
    input_feats = njoints * nfeats
    x2d = x.reshape(nframes * bs, d)

    if data_rep in ("rot6d", "xyz", "hml_vec"):
        y = pallas_linear(x2d, params["pose_w"], params["pose_b"],
                          tm=tm, compute_dtype=compute_dtype,
                          out_dtype=x.dtype).reshape(nframes, bs, input_feats)
    elif data_rep == "rot_vel":
        # One big row-tiled matmul with vel weights over ALL nframes*bs rows
        # (near-full MXU occupancy, amortized per-step overhead), then patch
        # frame 0 with a tiny bs-row pose matmul.  The redundant vel compute
        # for frame 0 is 1/nframes extra FLOPs (noise).
        y = pallas_linear(x2d, params["vel_w"], params["vel_b"],
                          tm=tm, compute_dtype=compute_dtype,
                          out_dtype=x.dtype).reshape(nframes, bs, input_feats)
        y0 = pallas_linear(x[0], params["pose_w"], params["pose_b"],
                           tm=tm, compute_dtype=compute_dtype,
                           out_dtype=x.dtype)                      # (bs, F)
        y = jax.lax.dynamic_update_slice(y, y0[None], (0, 0, 0))
    else:
        raise ValueError(data_rep)

    y = y.reshape(nframes, bs, njoints, nfeats)
    # Final permute left to XLA (pure layout glue, fused by the compiler).
    # TODO(synk): if profiling shows this transpose as a separate HBM pass,
    # fuse it by gridding over frame tiles with a (bs, F, TF)-shaped out_spec.
    return jnp.transpose(y, (1, 2, 3, 0))  # (bs, njoints, nfeats, nframes)


# ---------------------------------------------------------------------------
# Deterministic parameter init (mimics nn.Linear: U[-1/sqrt(in), 1/sqrt(in)])
# ---------------------------------------------------------------------------
def init_params(key, latent_dim, input_feats, data_rep):
    bound = 1.0 / jnp.sqrt(latent_dim)
    k = jax.random.split(key, 4)
    params = {
        "pose_w": jax.random.uniform(k[0], (latent_dim, input_feats),
                                     jnp.float32, -bound, bound),
        "pose_b": jax.random.uniform(k[1], (input_feats,),
                                     jnp.float32, -bound, bound),
    }
    if data_rep == "rot_vel":
        params["vel_w"] = jax.random.uniform(k[2], (latent_dim, input_feats),
                                             jnp.float32, -bound, bound),
        # jnp.stack-free: unwrap the accidental tuple
        params["vel_w"] = params["vel_w"][0]
        params["vel_b"] = jax.random.uniform(k[3], (input_feats,),
                                             jnp.float32, -bound, bound)
    return params


# ---------------------------------------------------------------------------
# Pure-JAX reference (correctness check)
# ---------------------------------------------------------------------------
def reference_forward(x, params, *, data_rep, njoints, nfeats):
    nframes, bs, d = x.shape
    if data_rep in ("rot6d", "xyz", "hml_vec"):
        y = x @ params["pose_w"] + params["pose_b"]
    else:  # rot_vel
        first = x[0:1] @ params["pose_w"] + params["pose_b"]
        vel = x[1:] @ params["vel_w"] + params["vel_b"]
        y = jnp.concatenate([first, vel], axis=0)
    y = y.reshape(nframes, bs, njoints, nfeats)
    return jnp.transpose(y, (1, 2, 3, 0))


if __name__ == "__main__":
    # Small shapes consistent with the module's forward.
    nframes, bs, latent_dim = 8, 2, 32
    njoints, nfeats = 4, 3
    input_feats = njoints * nfeats

    key = jax.random.PRNGKey(0)
    kx, kp = jax.random.split(key)
    x = jax.random.normal(kx, (nframes, bs, latent_dim), jnp.float32)

    ok = True

    # Exact f32 path for both data representations.
    for data_rep in ("rot6d", "rot_vel"):
        params = init_params(kp, latent_dim, input_feats, data_rep)
        fwd = jax.jit(functools.partial(output_process_forward,
                                        data_rep=data_rep,
                                        njoints=njoints, nfeats=nfeats))
        out = jax.block_until_ready(fwd(x, params))
        ref = reference_forward(x, params, data_rep=data_rep,
                                njoints=njoints, nfeats=nfeats)
        assert out.shape == (bs, njoints, nfeats, nframes)
        ok &= bool(jnp.allclose(out, ref, atol=1e-5, rtol=1e-5))

    # bf16-compute path (memory-bound win); f32 accumulation keeps it close.
    params = init_params(kp, latent_dim, input_feats, "rot_vel")
    fwd_bf16 = jax.jit(functools.partial(output_process_forward,
                                         data_rep="rot_vel",
                                         njoints=njoints, nfeats=nfeats,
                                         compute_dtype=jnp.bfloat16))
    out_bf16 = jax.block_until_ready(fwd_bf16(x, params))
    ref = reference_forward(x, params, data_rep="rot_vel",
                            njoints=njoints, nfeats=nfeats)
    ok &= out_bf16.shape == (bs, njoints, nfeats, nframes)
    ok &= bool(jnp.allclose(out_bf16, ref, atol=3e-2, rtol=3e-2))

    if ok:
        print("KERNEL_OK")
</pallas_src>

<mosaic_0001>
module attributes {stable_mosaic.version = 11 : i64} {
  func.func @_linear_kernel(%arg0: i32, %arg1: memref<16x32xf32, #tpu.memory_space<vmem>>, %arg2: memref<32x128xf32, #tpu.memory_space<vmem>>, %arg3: memref<1x128xf32, #tpu.memory_space<vmem>>, %arg4: memref<16x128xf32, #tpu.memory_space<vmem>>) attributes {dimension_semantics = [#tpu.dimension_semantics<parallel>], iteration_bounds = array<i64: 1>, scalar_prefetch = 0 : i64, scratch_operands = 0 : i64, tpu.core_type = #tpu.core_type<tc>, window_params = [{transform_indices = @transform_0, window_bounds = array<i64: 16, 32>}, {pipeline_mode = #tpu.pipeline_mode<synchronous>, transform_indices = @transform_1, window_bounds = array<i64: 32, 128>}, {pipeline_mode = #tpu.pipeline_mode<synchronous>, transform_indices = @transform_2, window_bounds = array<i64: 1, 128>}, {transform_indices = @transform_3, window_bounds = array<i64: 16, 128>}]} {
    %c0 = arith.constant 0 : index
    %c0_0 = arith.constant 0 : index
    %0 = vector.load %arg1[%c0, %c0_0] : memref<16x32xf32, #tpu.memory_space<vmem>>, vector<16x32xf32>
    %c0_1 = arith.constant 0 : index
    %c0_2 = arith.constant 0 : index
    %1 = vector.load %arg2[%c0_1, %c0_2] : memref<32x128xf32, #tpu.memory_space<vmem>>, vector<32x128xf32>
    %cst = arith.constant dense<0.000000e+00> : vector<16x128xf32>
    %2 = tpu.matmul %0, %1, %cst {dimension_numbers = #tpu.dot_dimension_numbers<[1], [0], [0], [1], [0, 0, 1, 1], [], []>} : vector<16x32xf32>, vector<32x128xf32>, vector<16x128xf32> -> vector<16x128xf32>
    %c0_3 = arith.constant 0 : index
    %c0_4 = arith.constant 0 : index
    %3 = vector.load %arg3[%c0_3, %c0_4] : memref<1x128xf32, #tpu.memory_space<vmem>>, vector<1x128xf32>
    %4 = vector.broadcast %3 : vector<1x128xf32> to vector<16x128xf32>
    %5 = arith.addf %2, %4 : vector<16x128xf32>
    %c0_5 = arith.constant 0 : index
    %c0_6 = arith.constant 0 : index
    %6 = vector.load %arg4[%c0_5, %c0_6] : memref<16x128xf32, #tpu.memory_space<vmem>>, vector<16x128xf32>
    tpu.vector_store %arg4[%c0_5, %c0_6], %5 {strides = array<i32>} : memref<16x128xf32, #tpu.memory_space<vmem>>, vector<16x128xf32>,
    return
  }
  func.func @transform_0(%arg0: i32) -> (i32, i32) {
    %c0_i32 = arith.constant 0 : i32
    %c0_i32_0 = arith.constant 0 : i32
    return %arg0, %c0_i32 : i32, i32
  }
  func.func @transform_1(%arg0: i32) -> (i32, i32) {
    %c0_i32 = arith.constant 0 : i32
    %c0_i32_0 = arith.constant 0 : i32
    %c0_i32_1 = arith.constant 0 : i32
    return %c0_i32, %c0_i32_0 : i32, i32
  }
  func.func @transform_2(%arg0: i32) -> (i32, i32) {
    %c0_i32 = arith.constant 0 : i32
    %c0_i32_0 = arith.constant 0 : i32
    %c0_i32_1 = arith.constant 0 : i32
    return %c0_i32, %c0_i32_0 : i32, i32
  }
  func.func @transform_3(%arg0: i32) -> (i32, i32) {
    %c0_i32 = arith.constant 0 : i32
    %c0_i32_0 = arith.constant 0 : i32
    return %arg0, %c0_i32 : i32, i32
  }
}

</mosaic_0001>

<llo_original>
// kernel: output_process_forward.1
$region0: #{output_process_forward.1}
  #allocation0 [shape = 'u32[]', space=smem, size = 0x4, offset = 0x4, fixed_abs, tag = 'smem constant byte address 0x4 - core index']
  #allocation1 [shape = 'u32[144,128]{1,0:T(1,128)}', space=vmem, size = 0x12000, scoped, tag = 'internal scratch']
  %s0 = inlined_call_operand.vmem [shape: f32[16,32], index: 0, kind: input, shape index: {}]
  %s1 = inlined_call_operand.vmem [shape: f32[32,128], index: 1, kind: input, shape index: {}]
  %s2 = inlined_call_operand.vmem [shape: f32[1,128], index: 2, kind: input, shape index: {}]
  %s3 = inlined_call_operand.vmem [shape: f32[16,128], index: 3, kind: output, shape index: {}]
  %s4 = sld [smem:[#allocation0]]
  $region22: #{output_process_forward.1} parent=0
    _
  %s6 = ssub.s32 1, %s4
  %s7 = scalar_select 0, %s6, %s4
  // Predicated region
  $region2: #{output_process_forward.1} parent=0 // pred_check
    _
  $region3: #{output_process_forward.1} parent=0 // pred_check_branch
    %9 = sbr.rel (0) target = $region5
  $region4: #{output_process_forward.1} parent=0 // pred_region
    _
  $region5: #{output_process_forward.1} parent=0 // pred_fallthru
    _
  // Predicated region
  $region6: #{output_process_forward.1} parent=0 // pred_check
    _
  $region7: #{output_process_forward.1} parent=0 // pred_check_branch
    %11 = sbr.rel (0) target = $region9
  $region8: #{output_process_forward.1} parent=0 // pred_region
    _
  $region9: #{output_process_forward.1} parent=0 // pred_fallthru
    _
  // Predicated region
  $region10: #{output_process_forward.1} parent=0 // pred_check
    _
  $region11: #{output_process_forward.1} parent=0 // pred_check_branch
    %13 = sbr.rel (0) target = $region13
  $region12: #{output_process_forward.1} parent=0 // pred_region
    _
  $region13: #{output_process_forward.1} parent=0 // pred_fallthru
    _
  %v14 = vld [vmem:[%s0] sm:$0xff]
  %v15 = vld [vmem:[%s0 + $0x8] sm:$0xff]
  %v16 = vld [vmem:[%s1] sm:$0xff]
  %v17 = vld [vmem:[%s1 + $0x8] sm:$0xff]
  %v18 = vld [vmem:[%s1 + $0x10] sm:$0xff]
  %v19 = vld [vmem:[%s1 + $0x18] sm:$0xff]
  %v20 = vld [vmem:[%s2] sm:$0x1]
  %v22 = vlaneseq
  %v23 = vshrl.u32 %v22, 7
  %v24 = vsub.s32 0, %v23
  %v25 = vrot.slane %v20, %v24
  %vm27 = vcmask 261120
  %v29 = vsel %vm27, %v14, 0
  %v32 = vsel %vm27, %v15, 0
  %34 = vmatprep.subr.mxu0 0.0
  %35 = vmatpush1.msra.mxu0 0.0
  %36 = vmatprep.subr.mxu0 0.0
  %37 = vmatpush1.msra.mxu0 0.0
  %38 = vmatprep.subr.mxu0 0.0
  %39 = vmatpush1.msra.mxu0 0.0
  %40 = vmatprep.subr.mxu0 0.0
  %41 = vmatpush1.msra.mxu0 0.0
  %42 = vmatprep.subr.mxu0 0.0
  %43 = vmatpush1.msra.mxu0 0.0
  %44 = vmatprep.subr.mxu0 0.0
  %45 = vmatpush1.msra.mxu0 0.0
  %46 = vmatprep.subr.mxu0 0.0
  %47 = vmatpush1.msra.mxu0 0.0
  %48 = vmatprep.subr.mxu0 0.0
  %49 = vmatpush1.msra.mxu0 0.0
  %50 = vmatprep.subr.mxu0 0.0
  %51 = vmatpush1.msra.mxu0 0.0
  %52 = vmatprep.subr.mxu0 0.0
  %53 = vmatpush1.msra.mxu0 0.0
  %54 = vmatprep.subr.mxu0 0.0
  %55 = vmatpush1.msra.mxu0 0.0
  %56 = vmatprep.subr.mxu0 0.0
  %57 = vmatpush1.msra.mxu0 0.0
  %58 = vmatprep.subr.mxu0 0.0
  %59 = vmatpush1.msra.mxu0 %v19
  %60 = vmatprep.subr.mxu0 0.0
  %61 = vmatpush1.msra.mxu0 %v18
  %62 = vmatprep.subr.mxu0 0.0
  %63 = vmatpush1.msra.mxu0 %v17
  %64 = vmatprep.subr.mxu0 0.0
  %65 = vmatpush1.msra.mxu0 %v16
  %66 = vmatprep.subr.mxu0 0.0
  %67 = vmatpush2.msra.mxu0 0.0
  %68 = vmatprep.subr.mxu0 0.0
  %69 = vmatpush2.msra.mxu0 0.0
  %70 = vmatprep.subr.mxu0 0.0
  %71 = vmatpush2.msra.mxu0 0.0
  %72 = vmatprep.subr.mxu0 0.0
  %73 = vmatpush2.msra.mxu0 0.0
  %74 = vmatprep.subr.mxu0 0.0
  %75 = vmatpush2.msra.mxu0 0.0
  %76 = vmatprep.subr.mxu0 0.0
  %77 = vmatpush2.msra.mxu0 0.0
  %78 = vmatprep.subr.mxu0 0.0
  %79 = vmatpush2.msra.mxu0 0.0
  %80 = vmatprep.subr.mxu0 0.0
  %81 = vmatpush2.msra.mxu0 0.0
  %82 = vmatprep.subr.mxu0 0.0
  %83 = vmatpush2.msra.mxu0 0.0
  %84 = vmatprep.subr.mxu0 0.0
  %85 = vmatpush2.msra.mxu0 0.0
  %86 = vmatprep.subr.mxu0 0.0
  %87 = vmatpush2.msra.mxu0 0.0
  %88 = vmatprep.subr.mxu0 0.0
  %89 = vmatpush2.msra.mxu0 0.0
  %90 = vmatprep.subr.mxu0 0.0
  %91 = vmatpush2.msra.mxu0 0.0
  %92 = vmatprep.subr.mxu0 0.0
  %93 = vmatpush2.msra.mxu0 0.0
  %94 = vmatprep.subr.mxu0 0.0
  %95 = vmatpush2.msra.mxu0 0.0
  %96 = vmatprep.subr.mxu0 0.0
  %97 = vmatpush2.msra.mxu0 0.0
  %98 = vmatprep.mubr.f32.mxu0 0.0
  %99 = vmatmul.mubr.f32.gmra.mxu0 %v29
  %v100 = vpop.f32.mrf.mxu0
  %v101 = vadd.f32 %v25, %v100
  %v102 = vpop.f32.mrf.mxu0
  %103 = vmatprep.mubr.f32.mxu0 0.0
  %104 = vmatmul.mubr.f32.gmra.mxu0 %v32
  %v105 = vpop.f32.mrf.mxu0
  %v106 = vadd.f32 %v25, %v105
  %v107 = vpop.f32.mrf.mxu0
  %108 = vdwg.mxu0
  %109 = vst [vmem:[%s3] sm:$0xff] %v101
  %110 = vst [vmem:[%s3 + $0x8] sm:$0xff] %v106
  // Predicated region
  $region14: #{output_process_forward.1} parent=0 // pred_check
    _
  $region15: #{output_process_forward.1} parent=0 // pred_check_branch
    %112 = sbr.rel (0) target = $region17
  $region16: #{output_process_forward.1} parent=0 // pred_region
    _
  $region17: #{output_process_forward.1} parent=0 // pred_fallthru
    _
  // Predicated region
  $region18: #{output_process_forward.1} parent=0 // pred_check
    _
  $region19: #{output_process_forward.1} parent=0 // pred_check_branch
    %114 = sbr.rel (0) target = $region21
  $region20: #{output_process_forward.1} parent=0 // pred_region
    _
  $region21: #{output_process_forward.1} parent=0 // pred_fallthru
    _

</llo_original>
